<compile_context>
chip_gen: v6e
topology: v6e:2x2x1
jax: 0.10.0
libtpu: 0.0.40
codegen_flags: <defaults>
</compile_context>

<pallas_src>
import numpy as np
import jax
import jax.numpy as jnp
from jax.experimental import pallas as pl
from jax.experimental.pallas import tpu as pltpu


def _layer_norm_kernel(scal_ref, x_ref, o_ref):
    """scal_ref: SMEM f32 (3,) = [eps, alpha, bias]; x_ref/o_ref: VMEM (TM, D)."""
    x = x_ref[...].astype(jnp.float32)                       # (TM, D), read once
    d = x.shape[-1]

    eps = scal_ref[0]
    alpha = scal_ref[1]
    bias = scal_ref[2]

    mean = jnp.mean(x, axis=-1, keepdims=True)                # (TM, 1)
    xc = x - mean                                             # kept live; x not re-read
    # torch.std default is unbiased: divide by (D - 1).
    var_unbiased = jnp.sum(xc * xc, axis=-1, keepdims=True) * (
        1.0 / float(max(d - 1, 1)))
    std = jnp.sqrt(var_unbiased)                              # (TM, 1)
    # One divide per row, broadcast multiply per element; eps OUTSIDE the sqrt
    # to match torch's (std + eps) exactly.
    inv = alpha / (std + eps)                                 # (TM, 1)
    o_ref[...] = (xc * inv + bias).astype(o_ref.dtype)


def _cdiv(a, b):
    return -(-a // b)


def _sublane_multiple(dtype):
    """Minimum row-tile multiple for the TPU sublane packing of this dtype."""
    itemsize = jnp.dtype(dtype).itemsize
    if itemsize >= 4:
        return 8
    if itemsize == 2:
        return 16
    return 32


def _pick_row_tile(n_rows, d, dtype,
                   target_bytes=2 * 1024 * 1024,
                   cap_bytes=4 * 1024 * 1024):
    """Row tile sized by BYTES of the f32 working copy (~2 MiB target, 4 MiB cap)."""
    sub = _sublane_multiple(dtype)
    row_f32 = d * 4
    tm = max(min(target_bytes // row_f32, cap_bytes // row_f32), sub)
    # Guarantee >= 2 grid steps whenever N permits, so v7x shards rows over
    # both TensorCores (v5e/v6e have 1 TC; this is harmless there).
    if n_rows >= 2 * sub:
        tm = min(tm, max(((n_rows // 2) // sub) * sub, sub))
    # Never exceed the sublane-rounded-up row count.
    tm = min(tm, _cdiv(n_rows, sub) * sub)
    tm = max((tm // sub) * sub, sub)
    # Rebalance so the padded tail tile stays small.
    num_tiles = max(_cdiv(n_rows, tm), 1)
    tm = max(_cdiv(_cdiv(n_rows, num_tiles), sub) * sub, sub)
    num_tiles = max(_cdiv(n_rows, tm), 1)
    return tm, num_tiles


def layer_normalization(x, *, eps=1e-6, alpha=1.0, bias=0.0):
    """x: (..., D). Normalizes over the last axis (matches the torch module)."""
    orig_shape = x.shape
    D = int(orig_shape[-1])
    N = int(np.prod(orig_shape[:-1])) if len(orig_shape) > 1 else 1
    x2 = x.reshape(N, D)

    tm, num_tiles = _pick_row_tile(N, D, x.dtype)
    n_pad = tm * num_tiles
    if n_pad != N:
        # Per-row op: zero pad rows are harmless and sliced off afterwards.
        x2 = jnp.pad(x2, ((0, n_pad - N), (0, 0)))

    # Explicit VMEM budget: in/out double buffers + f32 upcast temps + slack.
    itemsize = jnp.dtype(x.dtype).itemsize
    tile_io = tm * D * itemsize
    tile_f32 = tm * D * 4
    vmem_needed = 4 * tile_io + 3 * tile_f32 + (1 << 20)
    vmem_limit = int(min(max(vmem_needed, 16 << 20), 48 << 20))

    scal = jnp.array([eps, alpha, bias], dtype=jnp.float32)

    out = pl.pallas_call(
        _layer_norm_kernel,
        out_shape=jax.ShapeDtypeStruct((n_pad, D), x.dtype),
        grid=(num_tiles,),
        in_specs=[
            pl.BlockSpec(memory_space=pltpu.MemorySpace.SMEM),   # [eps, alpha, bias]
            pl.BlockSpec((tm, D), lambda i: (i, 0)),             # lane-dense row tile
        ],
        out_specs=pl.BlockSpec((tm, D), lambda i: (i, 0)),
        input_output_aliases={1: 0},                             # out aliases (padded) x
        compiler_params=pltpu.CompilerParams(
            dimension_semantics=("parallel",),
            vmem_limit_bytes=vmem_limit),
    )(scal, x2)

    if n_pad != N:
        out = out[:N]
    return out.reshape(orig_shape)


def _reference(x, eps=1e-6, alpha=1.0, bias=0.0):
    mean = jnp.mean(x, axis=-1, keepdims=True)
    std = jnp.std(x, axis=-1, keepdims=True, ddof=1)   # unbiased, like torch.std
    return alpha * (x - mean) / (std + eps) + bias


if __name__ == "__main__":
    # Small shapes with a lane-dense last dim (multiple of 128).
    B, S, D = 2, 8, 128
    key = jax.random.PRNGKey(0)
    x = jax.random.normal(key, (B, S, D), dtype=jnp.float32)

    # Reference computed before the kernel call (the kernel aliases its input).
    ref = _reference(x, eps=1e-6, alpha=1.0, bias=0.0)
    ref = jax.block_until_ready(ref)

    out = layer_normalization(x, eps=1e-6, alpha=1.0, bias=0.0)
    out = jax.block_until_ready(out)

    np.testing.assert_allclose(np.asarray(out), np.asarray(ref),
                               rtol=1e-5, atol=1e-5)

    print("KERNEL_OK")
</pallas_src>

<mosaic_0001>
module attributes {stable_mosaic.version = 11 : i64} {
  func.func @_layer_norm_kernel(%arg0: i32, %arg1: memref<3xf32, #tpu.memory_space<smem>>, %arg2: memref<8x128xf32, #tpu.memory_space<vmem>>, %arg3: memref<8x128xf32, #tpu.memory_space<vmem>>) attributes {dimension_semantics = [#tpu.dimension_semantics<parallel>], iteration_bounds = array<i64: 2>, scalar_prefetch = 0 : i64, scratch_operands = 0 : i64, tpu.core_type = #tpu.core_type<tc>, window_params = [{transform_indices = @transform_0, window_bounds = array<i64: 3>}, {transform_indices = @transform_1, window_bounds = array<i64: 8, 128>}, {transform_indices = @transform_2, window_bounds = array<i64: 8, 128>}]} {
    %c0 = arith.constant 0 : index
    %c0_0 = arith.constant 0 : index
    %0 = vector.load %arg2[%c0, %c0_0] : memref<8x128xf32, #tpu.memory_space<vmem>>, vector<8x128xf32>
    %c0_1 = arith.constant 0 : index
    %1 = memref.load %arg1[%c0_1] : memref<3xf32, #tpu.memory_space<smem>>
    %c1 = arith.constant 1 : index
    %2 = memref.load %arg1[%c1] : memref<3xf32, #tpu.memory_space<smem>>
    %c2 = arith.constant 2 : index
    %3 = memref.load %arg1[%c2] : memref<3xf32, #tpu.memory_space<smem>>
    %cst = arith.constant dense<0.000000e+00> : vector<8xf32>
    %4 = vector.multi_reduction <add>, %0, %cst [1] : vector<8x128xf32> to vector<8xf32>
    %5 = vector.shape_cast %4 : vector<8xf32> to vector<8x1xf32>
    %cst_2 = arith.constant 1.280000e+02 : f32
    %6 = vector.broadcast %cst_2 : f32 to vector<8x1xf32>
    %7 = arith.divf %5, %6 : vector<8x1xf32>
    %8 = vector.broadcast %7 : vector<8x1xf32> to vector<8x128xf32>
    %9 = arith.subf %0, %8 : vector<8x128xf32>
    %10 = arith.mulf %9, %9 : vector<8x128xf32>
    %cst_3 = arith.constant dense<0.000000e+00> : vector<8xf32>
    %11 = vector.multi_reduction <add>, %10, %cst_3 [1] : vector<8x128xf32> to vector<8xf32>
    %12 = vector.shape_cast %11 : vector<8xf32> to vector<8x1xf32>
    %cst_4 = arith.constant 0.00787401571 : f32
    %13 = vector.broadcast %cst_4 : f32 to vector<8x1xf32>
    %14 = arith.mulf %12, %13 : vector<8x1xf32>
    %15 = math.sqrt %14 : vector<8x1xf32>
    %16 = vector.broadcast %1 : f32 to vector<8x1xf32>
    %17 = arith.addf %15, %16 : vector<8x1xf32>
    %18 = vector.broadcast %2 : f32 to vector<8x1xf32>
    %19 = arith.divf %18, %17 : vector<8x1xf32>
    %20 = vector.broadcast %19 : vector<8x1xf32> to vector<8x128xf32>
    %21 = arith.mulf %9, %20 : vector<8x128xf32>
    %22 = vector.broadcast %3 : f32 to vector<8x128xf32>
    %23 = arith.addf %21, %22 : vector<8x128xf32>
    %c0_5 = arith.constant 0 : index
    %c0_6 = arith.constant 0 : index
    %24 = vector.load %arg3[%c0_5, %c0_6] : memref<8x128xf32, #tpu.memory_space<vmem>>, vector<8x128xf32>
    tpu.vector_store %arg3[%c0_5, %c0_6], %23 {strides = array<i32>} : memref<8x128xf32, #tpu.memory_space<vmem>>, vector<8x128xf32>,
    return
  }
  func.func @transform_0(%arg0: i32) -> i32 {
    %c0_i32 = arith.constant 0 : i32
    %c0_i32_0 = arith.constant 0 : i32
    return %c0_i32 : i32
  }
  func.func @transform_1(%arg0: i32) -> (i32, i32) {
    %c0_i32 = arith.constant 0 : i32
    %c0_i32_0 = arith.constant 0 : i32
    return %arg0, %c0_i32 : i32, i32
  }
  func.func @transform_2(%arg0: i32) -> (i32, i32) {
    %c0_i32 = arith.constant 0 : i32
    %c0_i32_0 = arith.constant 0 : i32
    return %arg0, %c0_i32 : i32, i32
  }
}

</mosaic_0001>

<llo_original>
// kernel: tpu_custom_call.1
$region0: #{tpu_custom_call.1}
  #allocation0 [shape = 'u32[]', space=smem, size = 0x4, offset = 0x4, fixed_abs, tag = 'smem constant byte address 0x4 - core index']
  #allocation1 [shape = 'u32[144,128]{1,0:T(1,128)}', space=vmem, size = 0x12000, scoped, tag = 'internal scratch']
  %s0 = inlined_call_operand.vmem [shape: f32[3], index: 0, kind: input, shape index: {}]
  %s1 = inlined_call_operand.hbm [shape: f32[16,128], index: 1, kind: input, shape index: {}, may-alias: {1,2}]
  %s2 = inlined_call_operand.hbm [shape: f32[16,128], index: 2, kind: output, shape index: {}, may-alias: {1,2}]
  %s3 = sld [smem:[#allocation0]]
  $region49: #{tpu_custom_call.1} parent=0
    _
  %s5 = ssub.s32 1, %s3
  %s6 = scalar_select 0, %s5, %s3
  $region1: #{tpu_custom_call.1} parent=0
    #allocation2 [shape = 'u8[512]{0}', space=smem, size = 0x200, scoped, tag = 'input window, operand 0, single buffered']
    #allocation3 [shape = 's32[2]{0}', space=sflag, size = 0x8, scoped, tag = 'scoped memory for tpu_custom_call.1']
    #allocation4 [shape = 's32[2]{0}', space=sflag, size = 0x8, scoped, tag = 'scoped memory for tpu_custom_call.1']
    #allocation5 [shape = 's32[2]{0}', space=sflag, size = 0x8, scoped, tag = 'scoped memory for tpu_custom_call.1']
    #allocation6 [shape = 'u8[8192]{0}', space=vmem, size = 0x2000, scoped, tag = 'input window, operand 1']
    #allocation7 [shape = 'u8[8192]{0}', space=vmem, size = 0x2000, scoped, tag = 'output window, operand 0']
    %7 = vsyncpa [#allocation5], 0
    %8 = vsyncpa [#allocation3], 0
    %s9 = scalar_lea.sflag [#allocation3], 1
    %10 = vsyncpa %s9, 0
    %11 = vsyncpa [#allocation4], 0
    %s12 = scalar_lea.sflag [#allocation4], 1
    %13 = vsyncpa %s12, 0
    loop: start=0, step=1, limit=4
    $region2: #{tpu_custom_call.1} parent=1 // loop_pre_header
      _
    $region3: #{tpu_custom_call.1} parent=1 // loop_header
      %s15 = sphi 0, %s19
      %p16 = scmp.ge.s32.totalorder %s15, 4
      %s23 = sphi 0, %s23
      %s25 = sphi 0, %s23
      %s26 = sphi 0, %s25
      %s40 = sphi 0, %s26
      %s46 = sphi 0, %s48
      %s49 = sphi 0, %s46
      %s50 = sphi 0, %s49
      %s66 = sphi 0, %s50
      %s72 = sphi 0, %s74
      %s75 = sphi 0, %s72
      %s76 = sphi 0, %s75
      %s92 = sphi 0, %s76
    $region4: #{tpu_custom_call.1} parent=1 // loop_header_branch
      %18 = sbr.rel (%p16) target = $region8
    $region5: #{tpu_custom_call.1} parent=1 // loop_body
      %s20 = ssub.s32 %s15, 1
      %s21 = ssub.s32 %s15, 2
      %s22 = sadd.s32 %s15, 1
      %s24 = sadd.s32 %s23, 1
      %p27 = scmp.eq.s32.totalorder %s15, 1
      %p28 = scmp.ne.s32.totalorder %s23, %s25
      %p29 = scmp.eq.s32.totalorder %s15, 0
      %p30 = por %p28, %p29
      %p31 = scmp.ne.s32.totalorder %s23, %s25
      %p32 = scmp.eq.s32.totalorder %s20, 1
      %p33 = por %p31, %p32
      %p34 = scmp.ne.s32.totalorder %s25, %s26
      %p35 = scmp.eq.s32.totalorder %s20, 0
      %p36 = por %p34, %p35
      %p37 = scmp.ne.s32.totalorder %s25, %s26
      %p38 = scmp.eq.s32.totalorder %s21, 1
      %p39 = por %p37, %p38
      %p41 = scmp.ne.s32.totalorder %s26, %s40
      %p42 = scmp.eq.s32.totalorder %s21, 0
      %p43 = por %p41, %p42
      %s44 = ssub.s32 %s15, %s22
      %p45 = scmp.eq.s32.totalorder %s44, 0
      %s47 = sadd.s32 %s46, 1
      %s48 = scalar_select %p45, %s46, %s47
      %p51 = pneg %p45
      %p52 = scmp.eq.s32.totalorder %s15, 1
      %p53 = por %p51, %p52
      %p54 = scmp.ne.s32.totalorder %s46, %s49
      %p55 = scmp.eq.s32.totalorder %s15, 0
      %p56 = por %p54, %p55
      %p57 = scmp.ne.s32.totalorder %s46, %s49
      %p58 = scmp.eq.s32.totalorder %s20, 1
      %p59 = por %p57, %p58
      %p60 = scmp.ne.s32.totalorder %s49, %s50
      %p61 = scmp.eq.s32.totalorder %s20, 0
      %p62 = por %p60, %p61
      %p63 = scmp.ne.s32.totalorder %s49, %s50
      %p64 = scmp.eq.s32.totalorder %s21, 1
      %p65 = por %p63, %p64
      %p67 = scmp.ne.s32.totalorder %s50, %s66
      %p68 = scmp.eq.s32.totalorder %s21, 0
      %p69 = por %p67, %p68
      %s70 = ssub.s32 %s15, %s22
      %p71 = scmp.eq.s32.totalorder %s70, 0
      %s73 = sadd.s32 %s72, 1
      %s74 = scalar_select %p71, %s72, %s73
      %p77 = pneg %p71
      %p78 = scmp.eq.s32.totalorder %s15, 1
      %p79 = por %p77, %p78
      %p80 = scmp.ne.s32.totalorder %s72, %s75
      %p81 = scmp.eq.s32.totalorder %s15, 0
      %p82 = por %p80, %p81
      %p83 = scmp.ne.s32.totalorder %s72, %s75
      %p84 = scmp.eq.s32.totalorder %s20, 1
      %p85 = por %p83, %p84
      %p86 = scmp.ne.s32.totalorder %s75, %s76
      %p87 = scmp.eq.s32.totalorder %s20, 0
      %p88 = por %p86, %p87
      %p89 = scmp.ne.s32.totalorder %s75, %s76
      %p90 = scmp.eq.s32.totalorder %s21, 1
      %p91 = por %p89, %p90
      %p93 = scmp.ne.s32.totalorder %s76, %s92
      %p94 = scmp.eq.s32.totalorder %s21, 0
      %p95 = por %p93, %p94
      %p96 = scmp.le.s32.totalorder 1, %s15
      %p97 = scmp.lt.s32.totalorder %s15, 3
      %p98 = pnand %p96, %p97
      %p99 = pneg %p98
      // Predicated region
      $region9: #{tpu_custom_call.1} parent=5 // pred_check
        _
      $region10: #{tpu_custom_call.1} parent=5 // pred_check_branch
        %101 = sbr.rel (%p98) target = $region12
      $region11: #{tpu_custom_call.1} parent=5 // pred_region
        %s102 = ssub.s32 %s15, 1
        // Predicated region
        $region13: #{tpu_custom_call.1} parent=11 // pred_check
          %p103 = pneg %p36
        $region14: #{tpu_custom_call.1} parent=11 // pred_check_branch
          %105 = sbr.rel (%p103) target = $region16
        $region15: #{tpu_custom_call.1} parent=11 // pred_region
          %s107 = ssub.s32 16, 16
          %108 = vsyncadd [#allocation5], %s107
          %s110 = sshll.u32 %s0, 4
          %s111 = int_to_ptr.vmem [resolvable:$true] %s110
          %113 = dma.vmem_to_smem %s111, 16, [#allocation2], [#allocation5]
        $region16: #{tpu_custom_call.1} parent=11 // pred_fallthru
          _
      $region12: #{tpu_custom_call.1} parent=5 // pred_fallthru
        _
      %p114 = scmp.lt.s32.totalorder %s15, 2
      // Predicated region
      $region17: #{tpu_custom_call.1} parent=5 // pred_check
        %p115 = pneg %p114
      $region18: #{tpu_custom_call.1} parent=5 // pred_check_branch
        %117 = sbr.rel (%p115) target = $region20
      $region19: #{tpu_custom_call.1} parent=5 // pred_region
        // Predicated region
        $region21: #{tpu_custom_call.1} parent=19 // pred_check
          %p118 = pneg %p56
        $region22: #{tpu_custom_call.1} parent=19 // pred_check_branch
          %120 = sbr.rel (%p118) target = $region24
        $region23: #{tpu_custom_call.1} parent=19 // pred_region
          %s121 = sand.u32 %s46, 1
          %s122 = scalar_lea.sflag [#allocation3], %s121
          %s123 = sand.u32 %s46, 1
          %s124 = smul.addr %s123, 8
          %s125 = scalar_lea.vmem [#allocation6], %s124
          %s127 = ssub.s32 128, 128
          %128 = vsyncadd %s122, %s127
          %s129 = smul.addr %s15, 128
          %s130 = scalar_lea.hbm %s1, %s129
          %s132 = sshll.u32 %s125, 4
          %s133 = int_to_ptr.vmem [resolvable:$true] %s132
          %135 = dma.hbm_to_vmem [thread:$0]  %s130, 128, %s133, %s122
        $region24: #{tpu_custom_call.1} parent=19 // pred_fallthru
          _
      $region20: #{tpu_custom_call.1} parent=5 // pred_fallthru
        _
      %p136 = scmp.le.s32.totalorder 1, %s15
      %p137 = scmp.lt.s32.totalorder %s15, 3
      %p138 = pnand %p136, %p137
      %p139 = pneg %p138
      // Predicated region
      $region25: #{tpu_custom_call.1} parent=5 // pred_check
        _
      $region26: #{tpu_custom_call.1} parent=5 // pred_check_branch
        %141 = sbr.rel (%p138) target = $region28
      $region27: #{tpu_custom_call.1} parent=5 // pred_region
        %s142 = ssub.s32 %s15, 1
        // Predicated region
        $region29: #{tpu_custom_call.1} parent=27 // pred_check
          %p143 = pneg %p36
        $region30: #{tpu_custom_call.1} parent=27 // pred_check_branch
          %145 = sbr.rel (%p143) target = $region32
        $region31: #{tpu_custom_call.1} parent=27 // pred_region
          %146 = dma.done [#allocation5], 16
        $region32: #{tpu_custom_call.1} parent=27 // pred_fallthru
          _
        %s147 = sand.u32 %s49, 1
        %s148 = scalar_lea.sflag [#allocation3], %s147
        %s149 = sand.u32 %s49, 1
        %s150 = smul.addr %s149, 8
        %s151 = scalar_lea.vmem [#allocation6], %s150
        // Predicated region
        $region33: #{tpu_custom_call.1} parent=27 // pred_check
          %p152 = pneg %p62
        $region34: #{tpu_custom_call.1} parent=27 // pred_check_branch
          %154 = sbr.rel (%p152) target = $region36
        $region35: #{tpu_custom_call.1} parent=27 // pred_region
          %155 = dma.done %s148, 128
        $region36: #{tpu_custom_call.1} parent=27 // pred_fallthru
          _
        %156 = sfence
        %p157 = pneg %p36
        %p158 = pneg %p33
        %s159 = sand.u32 %s49, 1
        %s160 = scalar_lea.sflag [#allocation3], %s159
        %s161 = sand.u32 %s49, 1
        %s162 = smul.addr %s161, 8
        %s163 = scalar_lea.vmem [#allocation6], %s162
        %p164 = pneg %p62
        %p165 = pneg %p59
        %p166 = pneg %p88
        %p167 = pneg %p85
        %s168 = sand.u32 %s75, 1
        %s169 = scalar_lea.sflag [#allocation4], %s168
        %s170 = sand.u32 %s75, 1
        %s171 = smul.addr %s170, 8
        %s172 = scalar_lea.vmem [#allocation7], %s171
        %v173 = vld [vmem:[%s151] sm:$0xff]
        %s174 = sld [smem:[#allocation2]]
        %s175 = sld [smem:[#allocation2 + $0x1]]
        %s176 = sld [smem:[#allocation2 + $0x2]]
        %177 = vadd.xlane.f32.xlu0 %v173
        %v178 = vpop.xlane.xlu0 %177
        %v179 = vrcp.pop 128.0
        %v180 = vmul.f32 %v178, %v179
        %v181 = vsub.f32 %v173, %v180
        %v182 = vmul.f32 %v181, %v181
        %183 = vadd.xlane.f32.xlu0 %v182
        %v184 = vpop.xlane.xlu0 %183
        %v185 = vmul.f32 %v184, 0.007874016
        %v186 = vrsqrt.pop %v185
        %v187 = vmul.f32 %v185, %v186
        %vm188 = vcmp.eq.f32.partialorder %v185, inf
        %v189 = vsel %vm188, %v185, %v187
        %vm190 = vcmp.eq.f32.partialorder %v185, 0.0
        %v191 = vand.u32 %v185, 2147483648
        %v192 = vsel %vm190, %v191, %v189
        %v193 = vstv %s174
        %v194 = vadd.f32 %v192, %v193
        %v195 = vstv %s175
        %v196 = vrcp.pop %v194
        %v197 = vmul.f32 %v195, %v196
        %v198 = vmul.f32 %v181, %v197
        %v199 = vstv %s176
        %v200 = vadd.f32 %v198, %v199
        %201 = vst [vmem:[%s172] sm:$0xff] %v200
        %s202 = sand.u32 %s75, 1
        %s203 = scalar_lea.sflag [#allocation4], %s202
        %s204 = sand.u32 %s75, 1
        %s205 = smul.addr %s204, 8
        %s206 = scalar_lea.vmem [#allocation7], %s205
        // Predicated region
        $region37: #{tpu_custom_call.1} parent=27 // pred_check
          %p207 = pneg %p85
        $region38: #{tpu_custom_call.1} parent=27 // pred_check_branch
          %209 = sbr.rel (%p207) target = $region40
        $region39: #{tpu_custom_call.1} parent=27 // pred_region
          %s211 = ssub.s32 128, 128
          %212 = vsyncadd %s203, %s211
          %s213 = smul.addr %s20, 128
          %s214 = scalar_lea.hbm %s2, %s213
          %s216 = sshll.u32 %s206, 4
          %s217 = int_to_ptr.vmem [resolvable:$true] %s216
          %219 = dma.vmem_to_hbm [thread:$0]  %s217, 128, %s214, %s203
        $region40: #{tpu_custom_call.1} parent=27 // pred_fallthru
          _
      $region28: #{tpu_custom_call.1} parent=5 // pred_fallthru
        _
      %p220 = scmp.le.s32.totalorder 2, %s15
      // Predicated region
      $region41: #{tpu_custom_call.1} parent=5 // pred_check
        %p221 = pneg %p220
      $region42: #{tpu_custom_call.1} parent=5 // pred_check_branch
        %223 = sbr.rel (%p221) target = $region44
      $region43: #{tpu_custom_call.1} parent=5 // pred_region
        %s224 = ssub.s32 %s15, 2
        // Predicated region
        $region45: #{tpu_custom_call.1} parent=43 // pred_check
          %p225 = pneg %p91
        $region46: #{tpu_custom_call.1} parent=43 // pred_check_branch
          %227 = sbr.rel (%p225) target = $region48
        $region47: #{tpu_custom_call.1} parent=43 // pred_region
          %s228 = sand.u32 %s76, 1
          %s229 = scalar_lea.sflag [#allocation4], %s228
          %s230 = sand.u32 %s76, 1
          %s231 = smul.addr %s230, 8
          %s232 = scalar_lea.vmem [#allocation7], %s231
          %233 = dma.done %s229, 128
        $region48: #{tpu_custom_call.1} parent=43 // pred_fallthru
          _
      $region44: #{tpu_custom_call.1} parent=5 // pred_fallthru
        _
    $region6: #{tpu_custom_call.1} parent=1 // loop_footer
      %s19 = sadd.s32 1, %s15
    $region7: #{tpu_custom_call.1} parent=1 // loop_footer_branch
      %14 = sbr.rel target = $region3
    $region8: #{tpu_custom_call.1} parent=1 // loop_exit
      _
    %234 = vsyncpa [#allocation3], 1
    %s235 = scalar_lea.sflag [#allocation3], 1
    %236 = vsyncpa %s235, 1
    %237 = vsyncpa [#allocation4], 1
    %s238 = scalar_lea.sflag [#allocation4], 1
    %239 = vsyncpa %s238, 1
    %240 = vsyncpa [#allocation5], 1
    %s241 = scalar_lea.sflag [#allocation5], 1
    %242 = vsyncpa %s241, 1

</llo_original>
